<compile_context>
chip_gen: v6e
topology: v6e:2x2x1
jax: 0.10.0
libtpu: 0.0.40
codegen_flags: <defaults>
</compile_context>

<pallas_src>
import jax
import jax.numpy as jnp
from jax.experimental import pallas as pl
from jax.experimental.pallas import tpu as pltpu


def fused_affine_kernel(wb_ref, xt_ref, o_ref):
    # wb_ref: SMEM (3,) = [w_eff0, w_eff1, b_eff]
    # xt_ref: VMEM (2, TN)  -- features on sublanes, batch on lanes
    # o_ref : VMEM (1, TN)  -- lane-dense output tile
    w_a = wb_ref[0]
    w_b = wb_ref[1]
    bias = wb_ref[2]
    y = xt_ref[0:1, :] * w_a + xt_ref[1:2, :] * w_b + bias
    o_ref[...] = y.astype(o_ref.dtype)


def _choose_tile(n, max_tn):
    """Largest 128-aligned lane tile that still gives >=2 balanced grid steps
    (v7x megacore) when there is enough data; capped at max_tn so the
    double-buffered working set (~24*tn bytes) stays tiny on every chip."""
    lane = 128
    n_up = pl.cdiv(n, lane) * lane
    half = pl.cdiv(pl.cdiv(n_up, 2), lane) * lane
    return int(max(lane, min(max_tn, half)))


def mlp_forward(x, w1, b1, w2, b2, *, max_tn=64 * 1024, small_n_fast_path=1024):
    n, fin = x.shape          # (N, 2)
    fout = w2.shape[1]        # 1

    # --- Fuse the two linear layers (exact: no activation in between) ---
    w_eff = (w1 @ w2).astype(jnp.float32)            # (2, 1)
    b_eff = (b1 @ w2 + b2).astype(jnp.float32)       # (1, 1)

    # --- Tiny batches: a single fused XLA op beats any kernel launch ---
    if n < small_n_fast_path:
        return (x @ w_eff + b_eff).astype(x.dtype)

    wb = jnp.concatenate([w_eff.reshape(-1), b_eff.reshape(-1)])  # (3,)

    tn = _choose_tile(n, max_tn)
    grid = (pl.cdiv(n, tn),)   # partial last block allowed; no jnp.pad pass

    # Lane-dense view of x; allow_input_fusion lets XLA fuse this transpose
    # into the pallas_call operand DMA instead of materializing it in HBM.
    xt = x.T                                  # (2, N)

    yt = pl.pallas_call(
        fused_affine_kernel,
        out_shape=jax.ShapeDtypeStruct((fout, n), x.dtype),
        grid=grid,
        in_specs=[
            # 3 fused scalars -> SMEM, no padded VMEM tile / extra DMA buffer.
            pl.BlockSpec(memory_space=pltpu.MemorySpace.SMEM),
            # x tile: full feature dim (2 == array dim), lane-dense batch tile.
            pl.BlockSpec((fin, tn), lambda i: (0, i)),
        ],
        out_specs=pl.BlockSpec((fout, tn), lambda i: (0, i)),
        compiler_params=pltpu.CompilerParams(
            dimension_semantics=("parallel",),
            allow_input_fusion=[False, True],
        ),
        cost_estimate=pl.CostEstimate(
            flops=4 * n, transcendentals=0, bytes_accessed=12 * n),
    )(wb, xt)

    return yt.T                               # (N, 1)


def init_params(key):
    # Deterministic init mirroring nn.Linear's uniform(-1/sqrt(fan_in), ...).
    k1, k2, k3, k4 = jax.random.split(key, 4)
    fin1, hid, fout = 2, 8, 1
    bound1 = 1.0 / jnp.sqrt(fin1)
    bound2 = 1.0 / jnp.sqrt(hid)
    w1 = jax.random.uniform(k1, (fin1, hid), jnp.float32, -bound1, bound1)
    b1 = jax.random.uniform(k2, (1, hid), jnp.float32, -bound1, bound1)
    w2 = jax.random.uniform(k3, (hid, fout), jnp.float32, -bound2, bound2)
    b2 = jax.random.uniform(k4, (1, fout), jnp.float32, -bound2, bound2)
    return w1, b1, w2, b2


def _ref_forward(x, w1, b1, w2, b2):
    # Pure-JAX reference of the original two-layer forward pass.
    return (x @ w1 + b1) @ w2 + b2


if __name__ == "__main__":
    key = jax.random.PRNGKey(0)
    pkey, k1, k2, k3 = jax.random.split(key, 4)
    w1, b1, w2, b2 = init_params(pkey)

    # 1) Kernel path, batch a multiple of the tile -> 2 balanced grid steps.
    x_a = jax.random.normal(k1, (4096, 2), jnp.float32)
    out_a = jax.block_until_ready(mlp_forward(x_a, w1, b1, w2, b2))
    assert out_a.shape == (4096, 1)
    assert jnp.allclose(out_a, _ref_forward(x_a, w1, b1, w2, b2),
                        atol=1e-5, rtol=1e-5)

    # 2) Kernel path with a ragged batch (partial last block, no jnp.pad).
    x_b = jax.random.normal(k2, (1500, 2), jnp.float32)
    out_b = jax.block_until_ready(mlp_forward(x_b, w1, b1, w2, b2))
    assert out_b.shape == (1500, 1)
    assert jnp.allclose(out_b, _ref_forward(x_b, w1, b1, w2, b2),
                        atol=1e-5, rtol=1e-5)

    # 3) Tiny-batch fast path (pure XLA, no kernel launch).
    x_c = jax.random.normal(k3, (100, 2), jnp.float32)
    out_c = jax.block_until_ready(mlp_forward(x_c, w1, b1, w2, b2))
    assert out_c.shape == (100, 1)
    assert jnp.allclose(out_c, _ref_forward(x_c, w1, b1, w2, b2),
                        atol=1e-5, rtol=1e-5)

    print("KERNEL_OK")
</pallas_src>

<mosaic_0001>
module attributes {stable_mosaic.version = 11 : i64} {
  func.func @fused_affine_kernel(%arg0: i32, %arg1: memref<3xf32, #tpu.memory_space<smem>>, %arg2: memref<2x2048xf32, #tpu.memory_space<vmem>>, %arg3: memref<1x2048xf32, #tpu.memory_space<vmem>>) attributes {dimension_semantics = [#tpu.dimension_semantics<parallel>], iteration_bounds = array<i64: 2>, scalar_prefetch = 0 : i64, scratch_operands = 0 : i64, tpu.core_type = #tpu.core_type<tc>, window_params = [{transform_indices = @transform_0, window_bounds = array<i64: 3>}, {transform_indices = @transform_1, window_bounds = array<i64: 2, 2048>}, {transform_indices = @transform_2, window_bounds = array<i64: 1, 2048>}]} {
    %c0 = arith.constant 0 : index
    %0 = memref.load %arg1[%c0] : memref<3xf32, #tpu.memory_space<smem>>
    %c1 = arith.constant 1 : index
    %1 = memref.load %arg1[%c1] : memref<3xf32, #tpu.memory_space<smem>>
    %c2 = arith.constant 2 : index
    %2 = memref.load %arg1[%c2] : memref<3xf32, #tpu.memory_space<smem>>
    %c0_0 = arith.constant 0 : index
    %c0_1 = arith.constant 0 : index
    %3 = vector.load %arg2[%c0_0, %c0_1] : memref<2x2048xf32, #tpu.memory_space<vmem>>, vector<1x2048xf32>
    %4 = vector.broadcast %0 : f32 to vector<1x2048xf32>
    %5 = arith.mulf %3, %4 : vector<1x2048xf32>
    %c1_2 = arith.constant 1 : index
    %c0_3 = arith.constant 0 : index
    %6 = vector.load %arg2[%c1_2, %c0_3] : memref<2x2048xf32, #tpu.memory_space<vmem>>, vector<1x2048xf32>
    %7 = vector.broadcast %1 : f32 to vector<1x2048xf32>
    %8 = arith.mulf %6, %7 : vector<1x2048xf32>
    %9 = arith.addf %5, %8 : vector<1x2048xf32>
    %10 = vector.broadcast %2 : f32 to vector<1x2048xf32>
    %11 = arith.addf %9, %10 : vector<1x2048xf32>
    %c0_4 = arith.constant 0 : index
    %c0_5 = arith.constant 0 : index
    %12 = vector.load %arg3[%c0_4, %c0_5] : memref<1x2048xf32, #tpu.memory_space<vmem>>, vector<1x2048xf32>
    tpu.vector_store %arg3[%c0_4, %c0_5], %11 {strides = array<i32>} : memref<1x2048xf32, #tpu.memory_space<vmem>>, vector<1x2048xf32>,
    return
  }
  func.func @transform_0(%arg0: i32) -> i32 {
    %c0_i32 = arith.constant 0 : i32
    %c0_i32_0 = arith.constant 0 : i32
    return %c0_i32 : i32
  }
  func.func @transform_1(%arg0: i32) -> (i32, i32) {
    %c0_i32 = arith.constant 0 : i32
    %c0_i32_0 = arith.constant 0 : i32
    return %c0_i32, %arg0 : i32, i32
  }
  func.func @transform_2(%arg0: i32) -> (i32, i32) {
    %c0_i32 = arith.constant 0 : i32
    %c0_i32_0 = arith.constant 0 : i32
    return %c0_i32, %arg0 : i32, i32
  }
}

</mosaic_0001>

<llo_original>
// kernel: tpu_custom_call.1
$region0: #{tpu_custom_call.1}
  #allocation0 [shape = 'u32[]', space=smem, size = 0x4, offset = 0x4, fixed_abs, tag = 'smem constant byte address 0x4 - core index']
  #allocation1 [shape = 'u32[144,128]{1,0:T(1,128)}', space=vmem, size = 0x12000, scoped, tag = 'internal scratch']
  %s0 = inlined_call_operand.hbm [shape: f32[3], index: 0, kind: input, shape index: {}]
  %s1 = inlined_call_operand.hbm [shape: f32[2,4096], index: 1, kind: input, shape index: {}]
  %s2 = inlined_call_operand.hbm [shape: f32[1,4096], index: 2, kind: output, shape index: {}]
  %s3 = sld [smem:[#allocation0]]
  $region49: #{tpu_custom_call.1} parent=0
    _
  %s5 = ssub.s32 1, %s3
  %s6 = scalar_select 0, %s5, %s3
  $region1: #{tpu_custom_call.1} parent=0
    #allocation2 [shape = 'u8[512]{0}', space=smem, size = 0x200, scoped, tag = 'input window, operand 0, single buffered']
    #allocation3 [shape = 's32[2]{0}', space=sflag, size = 0x8, scoped, tag = 'scoped memory for tpu_custom_call.1']
    #allocation4 [shape = 's32[2]{0}', space=sflag, size = 0x8, scoped, tag = 'scoped memory for tpu_custom_call.1']
    #allocation5 [shape = 's32[2]{0}', space=sflag, size = 0x8, scoped, tag = 'scoped memory for tpu_custom_call.1']
    #allocation6 [shape = 'u8[32768]{0}', space=vmem, size = 0x8000, scoped, tag = 'input window, operand 1']
    #allocation7 [shape = 'u8[16384]{0}', space=vmem, size = 0x4000, scoped, tag = 'output window, operand 0']
    %7 = vsyncpa [#allocation5], 0
    %8 = vsyncpa [#allocation3], 0
    %s9 = scalar_lea.sflag [#allocation3], 1
    %10 = vsyncpa %s9, 0
    %11 = vsyncpa [#allocation4], 0
    %s12 = scalar_lea.sflag [#allocation4], 1
    %13 = vsyncpa %s12, 0
    loop: start=0, step=1, limit=4
    $region2: #{tpu_custom_call.1} parent=1 // loop_pre_header
      _
    $region3: #{tpu_custom_call.1} parent=1 // loop_header
      %s15 = sphi 0, %s19
      %p16 = scmp.ge.s32.totalorder %s15, 4
      %s23 = sphi 0, %s23
      %s25 = sphi 0, %s23
      %s26 = sphi 0, %s25
      %s40 = sphi 0, %s26
      %s46 = sphi 0, %s48
      %s49 = sphi 0, %s46
      %s50 = sphi 0, %s49
      %s66 = sphi 0, %s50
      %s72 = sphi 0, %s74
      %s75 = sphi 0, %s72
      %s76 = sphi 0, %s75
      %s92 = sphi 0, %s76
    $region4: #{tpu_custom_call.1} parent=1 // loop_header_branch
      %18 = sbr.rel (%p16) target = $region8
    $region5: #{tpu_custom_call.1} parent=1 // loop_body
      %s20 = ssub.s32 %s15, 1
      %s21 = ssub.s32 %s15, 2
      %s22 = sadd.s32 %s15, 1
      %s24 = sadd.s32 %s23, 1
      %p27 = scmp.eq.s32.totalorder %s15, 1
      %p28 = scmp.ne.s32.totalorder %s23, %s25
      %p29 = scmp.eq.s32.totalorder %s15, 0
      %p30 = por %p28, %p29
      %p31 = scmp.ne.s32.totalorder %s23, %s25
      %p32 = scmp.eq.s32.totalorder %s20, 1
      %p33 = por %p31, %p32
      %p34 = scmp.ne.s32.totalorder %s25, %s26
      %p35 = scmp.eq.s32.totalorder %s20, 0
      %p36 = por %p34, %p35
      %p37 = scmp.ne.s32.totalorder %s25, %s26
      %p38 = scmp.eq.s32.totalorder %s21, 1
      %p39 = por %p37, %p38
      %p41 = scmp.ne.s32.totalorder %s26, %s40
      %p42 = scmp.eq.s32.totalorder %s21, 0
      %p43 = por %p41, %p42
      %s44 = ssub.s32 %s15, %s22
      %p45 = scmp.eq.s32.totalorder %s44, 0
      %s47 = sadd.s32 %s46, 1
      %s48 = scalar_select %p45, %s46, %s47
      %p51 = pneg %p45
      %p52 = scmp.eq.s32.totalorder %s15, 1
      %p53 = por %p51, %p52
      %p54 = scmp.ne.s32.totalorder %s46, %s49
      %p55 = scmp.eq.s32.totalorder %s15, 0
      %p56 = por %p54, %p55
      %p57 = scmp.ne.s32.totalorder %s46, %s49
      %p58 = scmp.eq.s32.totalorder %s20, 1
      %p59 = por %p57, %p58
      %p60 = scmp.ne.s32.totalorder %s49, %s50
      %p61 = scmp.eq.s32.totalorder %s20, 0
      %p62 = por %p60, %p61
      %p63 = scmp.ne.s32.totalorder %s49, %s50
      %p64 = scmp.eq.s32.totalorder %s21, 1
      %p65 = por %p63, %p64
      %p67 = scmp.ne.s32.totalorder %s50, %s66
      %p68 = scmp.eq.s32.totalorder %s21, 0
      %p69 = por %p67, %p68
      %s70 = ssub.s32 %s15, %s22
      %p71 = scmp.eq.s32.totalorder %s70, 0
      %s73 = sadd.s32 %s72, 1
      %s74 = scalar_select %p71, %s72, %s73
      %p77 = pneg %p71
      %p78 = scmp.eq.s32.totalorder %s15, 1
      %p79 = por %p77, %p78
      %p80 = scmp.ne.s32.totalorder %s72, %s75
      %p81 = scmp.eq.s32.totalorder %s15, 0
      %p82 = por %p80, %p81
      %p83 = scmp.ne.s32.totalorder %s72, %s75
      %p84 = scmp.eq.s32.totalorder %s20, 1
      %p85 = por %p83, %p84
      %p86 = scmp.ne.s32.totalorder %s75, %s76
      %p87 = scmp.eq.s32.totalorder %s20, 0
      %p88 = por %p86, %p87
      %p89 = scmp.ne.s32.totalorder %s75, %s76
      %p90 = scmp.eq.s32.totalorder %s21, 1
      %p91 = por %p89, %p90
      %p93 = scmp.ne.s32.totalorder %s76, %s92
      %p94 = scmp.eq.s32.totalorder %s21, 0
      %p95 = por %p93, %p94
      %p96 = scmp.le.s32.totalorder 1, %s15
      %p97 = scmp.lt.s32.totalorder %s15, 3
      %p98 = pnand %p96, %p97
      %p99 = pneg %p98
      // Predicated region
      $region9: #{tpu_custom_call.1} parent=5 // pred_check
        _
      $region10: #{tpu_custom_call.1} parent=5 // pred_check_branch
        %101 = sbr.rel (%p98) target = $region12
      $region11: #{tpu_custom_call.1} parent=5 // pred_region
        %s102 = ssub.s32 %s15, 1
        // Predicated region
        $region13: #{tpu_custom_call.1} parent=11 // pred_check
          %p103 = pneg %p36
        $region14: #{tpu_custom_call.1} parent=11 // pred_check_branch
          %105 = sbr.rel (%p103) target = $region16
        $region15: #{tpu_custom_call.1} parent=11 // pred_region
          %s107 = ssub.s32 16, 16
          %108 = vsyncadd [#allocation5], %s107
          %111 = dma.hbm_to_smem %s0, 16, [#allocation2], [#allocation5]
        $region16: #{tpu_custom_call.1} parent=11 // pred_fallthru
          _
      $region12: #{tpu_custom_call.1} parent=5 // pred_fallthru
        _
      %p112 = scmp.lt.s32.totalorder %s15, 2
      // Predicated region
      $region17: #{tpu_custom_call.1} parent=5 // pred_check
        %p113 = pneg %p112
      $region18: #{tpu_custom_call.1} parent=5 // pred_check_branch
        %115 = sbr.rel (%p113) target = $region20
      $region19: #{tpu_custom_call.1} parent=5 // pred_region
        // Predicated region
        $region21: #{tpu_custom_call.1} parent=19 // pred_check
          %p116 = pneg %p56
        $region22: #{tpu_custom_call.1} parent=19 // pred_check_branch
          %118 = sbr.rel (%p116) target = $region24
        $region23: #{tpu_custom_call.1} parent=19 // pred_region
          %s119 = sand.u32 %s46, 1
          %s120 = scalar_lea.sflag [#allocation3], %s119
          %s121 = sand.u32 %s46, 1
          %s122 = smul.addr %s121, 32
          %s123 = scalar_lea.vmem [#allocation6], %s122
          %s124 = smul.u32 16, %s15
          %s126 = ssub.s32 512, 512
          %127 = vsyncadd %s120, %s126
          %s128 = smul.addr %s124, 32
          %s129 = scalar_lea.hbm %s1, %s128
          %s131 = sshll.u32 %s123, 4
          %s132 = int_to_ptr.vmem [resolvable:$true] %s131
          %134 = dma.hbm_to_vmem [thread:$0]  %s129, 512, %s132, %s120
        $region24: #{tpu_custom_call.1} parent=19 // pred_fallthru
          _
      $region20: #{tpu_custom_call.1} parent=5 // pred_fallthru
        _
      %p135 = scmp.le.s32.totalorder 1, %s15
      %p136 = scmp.lt.s32.totalorder %s15, 3
      %p137 = pnand %p135, %p136
      %p138 = pneg %p137
      // Predicated region
      $region25: #{tpu_custom_call.1} parent=5 // pred_check
        _
      $region26: #{tpu_custom_call.1} parent=5 // pred_check_branch
        %140 = sbr.rel (%p137) target = $region28
      $region27: #{tpu_custom_call.1} parent=5 // pred_region
        %s141 = ssub.s32 %s15, 1
        // Predicated region
        $region29: #{tpu_custom_call.1} parent=27 // pred_check
          %p142 = pneg %p36
        $region30: #{tpu_custom_call.1} parent=27 // pred_check_branch
          %144 = sbr.rel (%p142) target = $region32
        $region31: #{tpu_custom_call.1} parent=27 // pred_region
          %145 = dma.done [#allocation5], 16
        $region32: #{tpu_custom_call.1} parent=27 // pred_fallthru
          _
        %s146 = sand.u32 %s49, 1
        %s147 = scalar_lea.sflag [#allocation3], %s146
        %s148 = sand.u32 %s49, 1
        %s149 = smul.addr %s148, 32
        %s150 = scalar_lea.vmem [#allocation6], %s149
        // Predicated region
        $region33: #{tpu_custom_call.1} parent=27 // pred_check
          %p151 = pneg %p62
        $region34: #{tpu_custom_call.1} parent=27 // pred_check_branch
          %153 = sbr.rel (%p151) target = $region36
        $region35: #{tpu_custom_call.1} parent=27 // pred_region
          %154 = dma.done %s147, 512
        $region36: #{tpu_custom_call.1} parent=27 // pred_fallthru
          _
        %155 = sfence
        %p156 = pneg %p36
        %p157 = pneg %p33
        %s158 = sand.u32 %s49, 1
        %s159 = scalar_lea.sflag [#allocation3], %s158
        %s160 = sand.u32 %s49, 1
        %s161 = smul.addr %s160, 32
        %s162 = scalar_lea.vmem [#allocation6], %s161
        %p163 = pneg %p62
        %p164 = pneg %p59
        %p165 = pneg %p88
        %p166 = pneg %p85
        %s167 = sand.u32 %s75, 1
        %s168 = scalar_lea.sflag [#allocation4], %s167
        %s169 = sand.u32 %s75, 1
        %s170 = smul.addr %s169, 16
        %s171 = scalar_lea.vmem [#allocation7], %s170
        %s172 = smul.u32 16, %s20
        %s173 = smul.u32 16, %s20
        %s174 = sld [smem:[#allocation2]]
        %s175 = sld [smem:[#allocation2 + $0x1]]
        %s176 = sld [smem:[#allocation2 + $0x2]]
        %v177 = vld [vmem:[%s150] ss:$2 sm:$0xff]
        %s178 = scalar_lea.vmem %s150, 16 [#allocation6]
        %v179 = vld [vmem:[%s178] ss:$2 sm:$0xff]
        %v180 = vstv %s174
        %v181 = vmul.f32 %v177, %v180
        %v182 = vmul.f32 %v179, %v180
        %s183 = scalar_lea.vmem %s150, 1 [#allocation6]
        %v184 = vld [vmem:[%s183] ss:$2 sm:$0xff]
        %s185 = scalar_lea.vmem %s150, 17 [#allocation6]
        %v186 = vld [vmem:[%s185] ss:$2 sm:$0xff]
        %v187 = vstv %s175
        %v188 = vmul.f32 %v184, %v187
        %v189 = vmul.f32 %v186, %v187
        %v190 = vadd.f32 %v181, %v188
        %v191 = vadd.f32 %v182, %v189
        %v192 = vstv %s176
        %v193 = vadd.f32 %v190, %v192
        %v194 = vadd.f32 %v191, %v192
        %195 = vst [vmem:[%s171] sm:$0xff] %v193
        %196 = vst [vmem:[%s171 + $0x8] sm:$0xff] %v194
        %s197 = sand.u32 %s75, 1
        %s198 = scalar_lea.sflag [#allocation4], %s197
        %s199 = sand.u32 %s75, 1
        %s200 = smul.addr %s199, 16
        %s201 = scalar_lea.vmem [#allocation7], %s200
        // Predicated region
        $region37: #{tpu_custom_call.1} parent=27 // pred_check
          %p202 = pneg %p85
        $region38: #{tpu_custom_call.1} parent=27 // pred_check_branch
          %204 = sbr.rel (%p202) target = $region40
        $region39: #{tpu_custom_call.1} parent=27 // pred_region
          %s205 = smul.u32 16, %s20
          %s207 = ssub.s32 256, 256
          %208 = vsyncadd %s198, %s207
          %s209 = smul.addr %s205, 16
          %s210 = scalar_lea.hbm %s2, %s209
          %s212 = sshll.u32 %s201, 4
          %s213 = int_to_ptr.vmem [resolvable:$true] %s212
          %215 = dma.vmem_to_hbm [thread:$0]  %s213, 256, %s210, %s198
        $region40: #{tpu_custom_call.1} parent=27 // pred_fallthru
          _
      $region28: #{tpu_custom_call.1} parent=5 // pred_fallthru
        _
      %p216 = scmp.le.s32.totalorder 2, %s15
      // Predicated region
      $region41: #{tpu_custom_call.1} parent=5 // pred_check
        %p217 = pneg %p216
      $region42: #{tpu_custom_call.1} parent=5 // pred_check_branch
        %219 = sbr.rel (%p217) target = $region44
      $region43: #{tpu_custom_call.1} parent=5 // pred_region
        %s220 = ssub.s32 %s15, 2
        // Predicated region
        $region45: #{tpu_custom_call.1} parent=43 // pred_check
          %p221 = pneg %p91
        $region46: #{tpu_custom_call.1} parent=43 // pred_check_branch
          %223 = sbr.rel (%p221) target = $region48
        $region47: #{tpu_custom_call.1} parent=43 // pred_region
          %s224 = sand.u32 %s76, 1
          %s225 = scalar_lea.sflag [#allocation4], %s224
          %s226 = sand.u32 %s76, 1
          %s227 = smul.addr %s226, 16
          %s228 = scalar_lea.vmem [#allocation7], %s227
          %229 = dma.done %s225, 256
        $region48: #{tpu_custom_call.1} parent=43 // pred_fallthru
          _
      $region44: #{tpu_custom_call.1} parent=5 // pred_fallthru
        _
    $region6: #{tpu_custom_call.1} parent=1 // loop_footer
      %s19 = sadd.s32 1, %s15
    $region7: #{tpu_custom_call.1} parent=1 // loop_footer_branch
      %14 = sbr.rel target = $region3
    $region8: #{tpu_custom_call.1} parent=1 // loop_exit
      _
    %230 = vsyncpa [#allocation3], 1
    %s231 = scalar_lea.sflag [#allocation3], 1
    %232 = vsyncpa %s231, 1
    %233 = vsyncpa [#allocation4], 1
    %s234 = scalar_lea.sflag [#allocation4], 1
    %235 = vsyncpa %s234, 1
    %236 = vsyncpa [#allocation5], 1
    %s237 = scalar_lea.sflag [#allocation5], 1
    %238 = vsyncpa %s237, 1

</llo_original>
